<compile_context>
chip_gen: v7x
topology: tpu7x:2x2x1
jax: 0.10.0
libtpu: 0.0.40
codegen_flags: <defaults>
</compile_context>

<pallas_src>
import math
import jax
import jax.numpy as jnp
from jax import lax
from jax.experimental import pallas as pl
from jax.experimental.pallas import tpu as pltpu


def _round_up(n, m):
    return ((n + m - 1) // m) * m


def _vmem_capacity_bytes():
    try:
        return int(pltpu.get_tpu_info().vmem_capacity_bytes)
    except Exception:
        return 64 << 20  # conservative (v7x per-TensorCore VMEM)


def _vmem_estimate(tm, tf, d_model_p, d_ff_p, ebytes, out_bytes, resident, use_acc):
    """Rough live-VMEM bytes for one pipelined step (double-buffered blocks)."""
    b = 0
    b += 2 * tm * d_model_p * ebytes            # x block (2 buffers)
    b += 2 * tm * d_model_p * out_bytes         # out block (2 buffers)
    if use_acc:
        b += tm * d_model_p * 4                 # f32 accumulator scratch
    b += tm * tf * (4 + ebytes)                 # f32 GELU intermediate + cast copy
    if resident:
        b += 2 * 2 * d_model_p * d_ff_p * ebytes    # both weights, full, buffered
    else:
        b += 2 * 2 * d_model_p * tf * ebytes        # streamed W1/W2 chunks
    return b


def _make_ann_kernel(resident, use_acc, approximate_gelu):
    inv_sqrt2 = 1.0 / math.sqrt(2.0)
    c_tanh = math.sqrt(2.0 / math.pi)

    def kernel(x_ref, w1_ref, w2_ref, o_ref, *scratch):
        j = pl.program_id(1)
        acc_ref = scratch[0] if use_acc else o_ref   # f32 accumulator

        @pl.when(j == 0)
        def _init():
            acc_ref[...] = jnp.zeros_like(acc_ref)

        if resident:
            # Full weights are resident in VMEM; pick this step's d_ff chunk.
            w1 = w1_ref[j]          # (d_model_p, tf)
            w2 = w2_ref[j]          # (tf, d_model_p)
        else:
            w1 = w1_ref[...]
            w2 = w2_ref[...]

        # First projection chunk (MXU, f32 accumulate).
        h = jnp.dot(x_ref[...], w1, preferred_element_type=jnp.float32)

        # GELU in f32.  tanh form routes the transcendental to the EUP slot
        # (co-issues with MXU/VALU); erf form kept for strict torch parity.
        if approximate_gelu:
            h = 0.5 * h * (1.0 + jnp.tanh(jnp.float32(c_tanh)
                                          * (h + jnp.float32(0.044715) * h * h * h)))
        else:
            h = 0.5 * h * (1.0 + lax.erf(h * jnp.float32(inv_sqrt2)))

        # dropout=0 path of dropout_func: mask==1 a.s., /(1-0)=1 -> identity.
        # TODO(synk): for dropout > 0, seed pltpu.prng_seed and mask h with
        #             pltpu.prng_random_bits before the second matmul.

        # Second projection chunk, accumulated over d_ff tiles.
        acc_ref[...] += jnp.dot(h.astype(w2.dtype), w2,
                                preferred_element_type=jnp.float32)

        if use_acc:
            @pl.when(j == pl.num_programs(1) - 1)
            def _finalize():
                o_ref[...] = acc_ref[...].astype(o_ref.dtype)

    return kernel


def ann_layer_forward(x, w1, w2, *, dropout=0.0, tm=None, tf=512,
                      compute_dtype="auto", approximate_gelu=True,
                      force_streamed_weights=False):
    """Forward pass of ANNLayer.

    x : (..., d_model)     w1: (d_model, d_ff)     w2: (d_ff, d_model)
    compute_dtype: "auto" -> bf16 MXU when inputs are f32 (f32 GELU/acc kept),
                   or an explicit dtype, or None for no cast.
    approximate_gelu: tanh-GELU fast path (EUP); False -> exact erf (torch default).
    """
    if dropout != 0.0:
        # TODO(synk): dropout>0 uses torch.rand-based masking; not translated.
        raise NotImplementedError("only the dropout=0 path is implemented")

    d_model, d_ff = w1.shape
    lead_shape = x.shape[:-1]
    out_dtype = x.dtype
    out_bytes = jnp.dtype(out_dtype).itemsize

    x2d = x.reshape(-1, d_model)
    M = x2d.shape[0]

    # Compute dtype for the matmul operands.
    if compute_dtype == "auto":
        cdtype = jnp.bfloat16 if jnp.dtype(x.dtype) == jnp.dtype(jnp.float32) else x.dtype
    elif compute_dtype is None:
        cdtype = x.dtype
    else:
        cdtype = compute_dtype
    ebytes = jnp.dtype(cdtype).itemsize
    row_align = 8 if ebytes >= 4 else (16 if ebytes == 2 else 32)

    # Lane-dense padded sizes.
    d_model_p = _round_up(d_model, 128)
    tf_eff = max(128, (min(tf, _round_up(d_ff, 128)) // 128) * 128)
    d_ff_p = _round_up(d_ff, tf_eff)
    num_j = d_ff_p // tf_eff

    use_acc = jnp.dtype(out_dtype) != jnp.dtype(jnp.float32)

    # Per-chip VMEM budget (v7x: 64 MiB physical -> ~51 MiB budget).
    vmem_cap = _vmem_capacity_bytes()
    budget = int(0.8 * vmem_cap)

    # Resident-weights path when both padded weights (buffered) fit comfortably.
    weight_resident_bytes = 2 * 2 * d_model_p * d_ff_p * ebytes
    resident = (not force_streamed_weights) and (weight_resident_bytes <= 0.6 * budget)
    if resident and _vmem_estimate(row_align, tf_eff, d_model_p, d_ff_p,
                                   ebytes, out_bytes, True, use_acc) > budget:
        resident = False

    # Token tile: start big (amortize streamed weight bytes), shrink to fit VMEM.
    m_aligned = _round_up(M, row_align)
    tm_cap = 1024 if tm is None else tm
    tm_eff = min(tm_cap, m_aligned)
    tm_eff = max(row_align, (tm_eff // row_align) * row_align)
    while (tm_eff > row_align and
           _vmem_estimate(tm_eff, tf_eff, d_model_p, d_ff_p, ebytes, out_bytes,
                          resident, use_acc) > budget):
        tm_eff = max(row_align, _round_up(tm_eff // 2, row_align))
    # Megacore occupancy: prefer >= 2 token tiles when there is enough work.
    if m_aligned >= 2 * row_align and _round_up(M, tm_eff) // tm_eff < 2:
        tm_eff = max(row_align, _round_up((m_aligned + 1) // 2, row_align))
    M_p = _round_up(M, tm_eff)
    n_token_tiles = M_p // tm_eff

    # Zero padding is exact: zero rows/cols contribute 0 and GELU(0) = 0.
    x2d = jnp.pad(x2d, ((0, M_p - M), (0, d_model_p - d_model)))
    w1p = jnp.pad(w1, ((0, d_model_p - d_model), (0, d_ff_p - d_ff)))
    w2p = jnp.pad(w2, ((0, d_ff_p - d_ff), (0, d_model_p - d_model)))

    x2d = x2d.astype(cdtype)
    w1p = w1p.astype(cdtype)
    w2p = w2p.astype(cdtype)

    if resident:
        # (num_j, d_model_p, tf) / (num_j, tf, d_model_p): one full-array block,
        # constant index_map -> DMA'd from HBM once for the whole kernel.
        w1_arg = w1p.reshape(d_model_p, num_j, tf_eff).transpose(1, 0, 2)
        w2_arg = w2p.reshape(num_j, tf_eff, d_model_p)
        w_specs = [
            pl.BlockSpec((num_j, d_model_p, tf_eff), lambda i, j: (0, 0, 0)),
            pl.BlockSpec((num_j, tf_eff, d_model_p), lambda i, j: (0, 0, 0)),
        ]
    else:
        w1_arg, w2_arg = w1p, w2p
        w_specs = [
            pl.BlockSpec((d_model_p, tf_eff), lambda i, j: (0, j)),
            pl.BlockSpec((tf_eff, d_model_p), lambda i, j: (j, 0)),
        ]

    scratch = [pltpu.VMEM((tm_eff, d_model_p), jnp.float32)] if use_acc else []

    vmem_bytes = _vmem_estimate(tm_eff, tf_eff, d_model_p, d_ff_p, ebytes,
                                out_bytes, resident, use_acc)
    vmem_limit = int(min(max(vmem_bytes + (8 << 20), 32 << 20), budget))

    weight_bytes = 2 * d_model_p * d_ff_p * ebytes
    cost = pl.CostEstimate(
        flops=4 * M_p * d_model_p * d_ff_p,
        transcendentals=M_p * d_ff_p,
        bytes_accessed=int(M_p * d_model_p * (ebytes + out_bytes)
                           + weight_bytes * (1 if resident else n_token_tiles)),
    )

    kernel = _make_ann_kernel(resident, use_acc, approximate_gelu)

    out2d = pl.pallas_call(
        kernel,
        out_shape=jax.ShapeDtypeStruct((M_p, d_model_p), out_dtype),
        grid_spec=pltpu.PrefetchScalarGridSpec(
            num_scalar_prefetch=0,
            grid=(n_token_tiles, num_j),
            in_specs=[pl.BlockSpec((tm_eff, d_model_p), lambda i, j: (i, 0))] + w_specs,
            out_specs=pl.BlockSpec((tm_eff, d_model_p), lambda i, j: (i, 0)),
            scratch_shapes=scratch,
        ),
        compiler_params=pltpu.CompilerParams(
            dimension_semantics=("parallel", "arbitrary"),
            vmem_limit_bytes=vmem_limit,
        ),
        cost_estimate=cost,
    )(x2d, w1_arg, w2_arg)

    return out2d[:M, :d_model].reshape(*lead_shape, d_model)


def _kaiming_normal(key, shape):
    # torch.nn.init.kaiming_normal_ default: fan_in = shape[1], std = sqrt(2/fan_in).
    fan_in = shape[1]
    std = math.sqrt(2.0 / fan_in)
    return jax.random.normal(key, shape, dtype=jnp.float32) * std


def _reference(x, w1, w2):
    h = x @ w1
    h = 0.5 * h * (1.0 + lax.erf(h / jnp.sqrt(2.0)))
    return h @ w2


if __name__ == "__main__":
    key = jax.random.PRNGKey(0)
    kx, k1, k2, kx2, kx3 = jax.random.split(key, 5)

    # --- Case 1: strict torch parity (f32 compute, exact erf GELU) ------------
    batch, seq, d_model, d_ff = 2, 8, 32, 64
    x = jax.random.normal(kx, (batch, seq, d_model), dtype=jnp.float32)
    w1 = _kaiming_normal(k1, (d_model, d_ff))   # weights_1
    w2 = _kaiming_normal(k2, (d_ff, d_model))   # weights_2
    ref = _reference(x, w1, w2)

    out = jax.block_until_ready(
        ann_layer_forward(x, w1, w2, compute_dtype=jnp.float32, approximate_gelu=False))
    assert out.shape == (batch, seq, d_model)
    assert jnp.allclose(out, ref, atol=1e-5, rtol=1e-5)

    # Streamed-weights fallback path, same strict settings.
    out_s = jax.block_until_ready(
        ann_layer_forward(x, w1, w2, compute_dtype=jnp.float32, approximate_gelu=False,
                          force_streamed_weights=True))
    assert jnp.allclose(out_s, ref, atol=1e-5, rtol=1e-5)

    # --- Case 2: default fast path (bf16 MXU + tanh GELU), ragged shapes ------
    b2, s2, dm2, dff2 = 2, 7, 48, 100
    x2 = jax.random.normal(kx2, (b2, s2, dm2), dtype=jnp.float32)
    w1b = _kaiming_normal(k1, (dm2, dff2))
    w2b = _kaiming_normal(k2, (dff2, dm2))
    out2 = jax.block_until_ready(ann_layer_forward(x2, w1b, w2b))
    ref2 = _reference(x2, w1b, w2b)
    assert out2.shape == (b2, s2, dm2)
    assert jnp.allclose(out2, ref2, atol=1e-1, rtol=1e-1)

    # --- Case 3: bf16 inputs (exercises f32 acc scratch + cast epilogue) ------
    x3 = jax.random.normal(kx3, (batch, seq, d_model), dtype=jnp.bfloat16)
    out3 = jax.block_until_ready(
        ann_layer_forward(x3, w1.astype(jnp.bfloat16), w2.astype(jnp.bfloat16)))
    ref3 = _reference(x3.astype(jnp.float32), w1, w2)
    assert out3.shape == (batch, seq, d_model)
    assert jnp.allclose(out3.astype(jnp.float32), ref3, atol=2e-1, rtol=1e-1)

    print("KERNEL_OK")
</pallas_src>

<mosaic_0001>
module attributes {stable_mosaic.version = 11 : i64} {
  func.func @kernel(%arg0: i32, %arg1: i32, %arg2: memref<8x128xf32, #tpu.memory_space<vmem>>, %arg3: memref<1x128x128xf32, #tpu.memory_space<vmem>>, %arg4: memref<1x128x128xf32, #tpu.memory_space<vmem>>, %arg5: memref<8x128xf32, #tpu.memory_space<vmem>>) attributes {dimension_semantics = [#tpu.dimension_semantics<parallel>, #tpu.dimension_semantics<arbitrary>], iteration_bounds = array<i64: 2, 1>, scalar_prefetch = 0 : i64, scratch_operands = 0 : i64, tpu.core_type = #tpu.core_type<tc>, window_params = [{transform_indices = @transform_0, window_bounds = array<i64: 8, 128>}, {pipeline_mode = #tpu.pipeline_mode<synchronous>, transform_indices = @transform_1, window_bounds = array<i64: 1, 128, 128>}, {pipeline_mode = #tpu.pipeline_mode<synchronous>, transform_indices = @transform_2, window_bounds = array<i64: 1, 128, 128>}, {transform_indices = @transform_3, window_bounds = array<i64: 8, 128>}]} {
    %c0_i32 = arith.constant 0 : i32
    %0 = arith.cmpi eq, %arg1, %c0_i32 : i32
    %1 = arith.extui %0 : i1 to i32
    %c0_i32_0 = arith.constant 0 : i32
    %2 = arith.cmpi ne, %1, %c0_i32_0 : i32
    scf.if %2 {
      %cst_14 = arith.constant 0.000000e+00 : f32
      %23 = vector.broadcast %cst_14 : f32 to vector<8x128xf32>
      %c0_15 = arith.constant 0 : index
      %c0_16 = arith.constant 0 : index
      %24 = vector.load %arg5[%c0_15, %c0_16] : memref<8x128xf32, #tpu.memory_space<vmem>>, vector<8x128xf32>
      tpu.vector_store %arg5[%c0_15, %c0_16], %23 {strides = array<i32>} : memref<8x128xf32, #tpu.memory_space<vmem>>, vector<8x128xf32>,
    } else {
    }
    %3 = arith.index_cast %arg1 : i32 to index
    %c0 = arith.constant 0 : index
    %c0_1 = arith.constant 0 : index
    %4 = vector.load %arg3[%3, %c0, %c0_1] : memref<1x128x128xf32, #tpu.memory_space<vmem>>, vector<1x128x128xf32>
    %5 = vector.shape_cast %4 : vector<1x128x128xf32> to vector<128x128xf32>
    %6 = arith.index_cast %arg1 : i32 to index
    %c0_2 = arith.constant 0 : index
    %c0_3 = arith.constant 0 : index
    %7 = vector.load %arg4[%6, %c0_2, %c0_3] : memref<1x128x128xf32, #tpu.memory_space<vmem>>, vector<1x128x128xf32>
    %8 = vector.shape_cast %7 : vector<1x128x128xf32> to vector<128x128xf32>
    %c0_4 = arith.constant 0 : index
    %c0_5 = arith.constant 0 : index
    %9 = vector.load %arg2[%c0_4, %c0_5] : memref<8x128xf32, #tpu.memory_space<vmem>>, vector<8x128xf32>
    %cst = arith.constant dense<0.000000e+00> : vector<8x128xf32>
    %10 = tpu.matmul %9, %5, %cst {dimension_numbers = #tpu.dot_dimension_numbers<[1], [0], [0], [1], [0, 0, 1, 1], [], []>} : vector<8x128xf32>, vector<128x128xf32>, vector<8x128xf32> -> vector<8x128xf32>
    %cst_6 = arith.constant 5.000000e-01 : f32
    %11 = vector.broadcast %cst_6 : f32 to vector<8x128xf32>
    %12 = arith.mulf %11, %10 : vector<8x128xf32>
    %cst_7 = arith.constant 0.707106769 : f32
    %13 = vector.broadcast %cst_7 : f32 to vector<8x128xf32>
    %14 = arith.mulf %10, %13 : vector<8x128xf32>
    %15 = math.erf %14 : vector<8x128xf32>
    %cst_8 = arith.constant 1.000000e+00 : f32
    %16 = vector.broadcast %cst_8 : f32 to vector<8x128xf32>
    %17 = arith.addf %16, %15 : vector<8x128xf32>
    %18 = arith.mulf %12, %17 : vector<8x128xf32>
    %c0_9 = arith.constant 0 : index
    %c0_10 = arith.constant 0 : index
    %19 = vector.load %arg5[%c0_9, %c0_10] : memref<8x128xf32, #tpu.memory_space<vmem>>, vector<8x128xf32>
    %cst_11 = arith.constant dense<0.000000e+00> : vector<8x128xf32>
    %20 = tpu.matmul %18, %8, %cst_11 {dimension_numbers = #tpu.dot_dimension_numbers<[1], [0], [0], [1], [0, 0, 1, 1], [], []>} : vector<8x128xf32>, vector<128x128xf32>, vector<8x128xf32> -> vector<8x128xf32>
    %21 = arith.addf %19, %20 : vector<8x128xf32>
    %c0_12 = arith.constant 0 : index
    %c0_13 = arith.constant 0 : index
    %22 = vector.load %arg5[%c0_12, %c0_13] : memref<8x128xf32, #tpu.memory_space<vmem>>, vector<8x128xf32>
    tpu.vector_store %arg5[%c0_12, %c0_13], %21 {strides = array<i32>} : memref<8x128xf32, #tpu.memory_space<vmem>>, vector<8x128xf32>,
    return
  }
  func.func @transform_0(%arg0: i32, %arg1: i32) -> (i32, i32) {
    %c0_i32 = arith.constant 0 : i32
    %c0_i32_0 = arith.constant 0 : i32
    return %arg0, %c0_i32 : i32, i32
  }
  func.func @transform_1(%arg0: i32, %arg1: i32) -> (i32, i32, i32) {
    %c0_i32 = arith.constant 0 : i32
    %c0_i32_0 = arith.constant 0 : i32
    %c0_i32_1 = arith.constant 0 : i32
    %c0_i32_2 = arith.constant 0 : i32
    return %c0_i32, %c0_i32_0, %c0_i32_1 : i32, i32, i32
  }
  func.func @transform_2(%arg0: i32, %arg1: i32) -> (i32, i32, i32) {
    %c0_i32 = arith.constant 0 : i32
    %c0_i32_0 = arith.constant 0 : i32
    %c0_i32_1 = arith.constant 0 : i32
    %c0_i32_2 = arith.constant 0 : i32
    return %c0_i32, %c0_i32_0, %c0_i32_1 : i32, i32, i32
  }
  func.func @transform_3(%arg0: i32, %arg1: i32) -> (i32, i32) {
    %c0_i32 = arith.constant 0 : i32
    %c0_i32_0 = arith.constant 0 : i32
    return %arg0, %c0_i32 : i32, i32
  }
}

</mosaic_0001>

<llo_original>
// kernel: tpu_custom_call.1
$region0: #{tpu_custom_call.1}
  #allocation0 [shape = 'u32[]', space=smem, size = 0x4, offset = 0x4, fixed_abs, tag = 'smem constant byte address 0x4 - core index']
  #allocation1 [shape = 'u32[144,128]{1,0:T(1,128)}', space=vmem, size = 0x12000, scoped, tag = 'internal scratch']
  %s0 = inlined_call_operand.hbm [shape: f32[16,128], index: 0, kind: input, shape index: {}]
  %s1 = inlined_call_operand.hbm [shape: f32[1,128,128], index: 1, kind: input, shape index: {}]
  %s2 = inlined_call_operand.hbm [shape: f32[1,128,128], index: 2, kind: input, shape index: {}]
  %s3 = inlined_call_operand.hbm [shape: f32[16,128], index: 3, kind: output, shape index: {}]
  %s4 = sld [smem:[#allocation0]]
  $region61: #{tpu_custom_call.1} parent=0
    _
  %s6 = ssub.s32 1, %s4
  %s7 = scalar_select 0, %s6, %s4
  $region1: #{tpu_custom_call.1} parent=0
    #allocation2 [shape = 'u8[8192]{0}', space=vmem, size = 0x2000, scoped, tag = 'input window, operand 0']
    #allocation3 [shape = 's32[2]{0}', space=sflag, size = 0x8, scoped, tag = 'scoped memory for tpu_custom_call.1']
    #allocation4 [shape = 's32[2]{0}', space=sflag, size = 0x8, scoped, tag = 'scoped memory for tpu_custom_call.1']
    #allocation5 [shape = 'u8[65536]{0}', space=vmem, size = 0x10000, scoped, tag = 'input window, operand 1, single buffered']
    #allocation6 [shape = 's32[1]{0}', space=sflag, size = 0x4, scoped, tag = 'scoped memory for tpu_custom_call.1']
    #allocation7 [shape = 'u8[65536]{0}', space=vmem, size = 0x10000, scoped, tag = 'input window, operand 2, single buffered']
    #allocation8 [shape = 'u8[8192]{0}', space=vmem, size = 0x2000, scoped, tag = 'output window, operand 0']
    %8 = vsyncpa [#allocation3], 0
    %s9 = scalar_lea.sflag [#allocation3], 1
    %10 = vsyncpa %s9, 0
    %11 = vsyncpa [#allocation6], 0
    %12 = vsyncpa [#allocation4], 0
    %s13 = scalar_lea.sflag [#allocation4], 1
    %14 = vsyncpa %s13, 0
    loop: start=0, step=1, limit=4
    $region2: #{tpu_custom_call.1} parent=1 // loop_pre_header
      _
    $region3: #{tpu_custom_call.1} parent=1 // loop_header
      %s16 = sphi 0, %s20
      %p17 = scmp.ge.s32.totalorder %s16, 4
      %s23 = sphi 0, %s35
      %s24 = sphi 0, %s31
      %s25 = sphi 0, %s23
      %s26 = sphi 0, %s24
      %s27 = sphi 0, %s25
      %s28 = sphi 0, %s26
      %s38 = sphi 0, %s40
      %s41 = sphi 0, %s38
      %s42 = sphi 0, %s41
      %s58 = sphi 0, %s42
      %s62 = sphi 0, %s62
      %s64 = sphi 0, %s62
      %s65 = sphi 0, %s64
      %s79 = sphi 0, %s65
      %s83 = sphi 0, %s83
      %s85 = sphi 0, %s83
      %s86 = sphi 0, %s85
      %s100 = sphi 0, %s86
      %s106 = sphi 0, %s108
      %s109 = sphi 0, %s106
      %s110 = sphi 0, %s109
      %s126 = sphi 0, %s110
    $region4: #{tpu_custom_call.1} parent=1 // loop_header_branch
      %19 = sbr.rel (%p17) target = $region8
    $region5: #{tpu_custom_call.1} parent=1 // loop_body
      %s21 = ssub.s32 %s16, 1
      %s22 = ssub.s32 %s16, 2
      %s29 = sadd.s32 1, %s24
      %p30 = scmp.ge.s32.totalorder %s29, 1
      %s31 = scalar_select %p30, 0, %s29
      %s32 = sadd.s32 1, %s23
      %s33 = scalar_select %p30, %s32, %s23
      %p34 = scmp.ge.s32.totalorder %s33, 2
      %s35 = scalar_select %p34, 0, %s33
      %s36 = ssub.s32 %s23, %s35
      %p37 = scmp.eq.s32.totalorder %s36, 0
      %s39 = sadd.s32 %s38, 1
      %s40 = scalar_select %p37, %s38, %s39
      %p43 = pneg %p37
      %p44 = scmp.eq.s32.totalorder %s16, 1
      %p45 = por %p43, %p44
      %p46 = scmp.ne.s32.totalorder %s38, %s41
      %p47 = scmp.eq.s32.totalorder %s16, 0
      %p48 = por %p46, %p47
      %p49 = scmp.ne.s32.totalorder %s38, %s41
      %p50 = scmp.eq.s32.totalorder %s21, 1
      %p51 = por %p49, %p50
      %p52 = scmp.ne.s32.totalorder %s41, %s42
      %p53 = scmp.eq.s32.totalorder %s21, 0
      %p54 = por %p52, %p53
      %p55 = scmp.ne.s32.totalorder %s41, %s42
      %p56 = scmp.eq.s32.totalorder %s22, 1
      %p57 = por %p55, %p56
      %p59 = scmp.ne.s32.totalorder %s42, %s58
      %p60 = scmp.eq.s32.totalorder %s22, 0
      %p61 = por %p59, %p60
      %s63 = sadd.s32 %s62, 1
      %p66 = scmp.eq.s32.totalorder %s16, 1
      %p67 = scmp.ne.s32.totalorder %s62, %s64
      %p68 = scmp.eq.s32.totalorder %s16, 0
      %p69 = por %p67, %p68
      %p70 = scmp.ne.s32.totalorder %s62, %s64
      %p71 = scmp.eq.s32.totalorder %s21, 1
      %p72 = por %p70, %p71
      %p73 = scmp.ne.s32.totalorder %s64, %s65
      %p74 = scmp.eq.s32.totalorder %s21, 0
      %p75 = por %p73, %p74
      %p76 = scmp.ne.s32.totalorder %s64, %s65
      %p77 = scmp.eq.s32.totalorder %s22, 1
      %p78 = por %p76, %p77
      %p80 = scmp.ne.s32.totalorder %s65, %s79
      %p81 = scmp.eq.s32.totalorder %s22, 0
      %p82 = por %p80, %p81
      %s84 = sadd.s32 %s83, 1
      %p87 = scmp.eq.s32.totalorder %s16, 1
      %p88 = scmp.ne.s32.totalorder %s83, %s85
      %p89 = scmp.eq.s32.totalorder %s16, 0
      %p90 = por %p88, %p89
      %p91 = scmp.ne.s32.totalorder %s83, %s85
      %p92 = scmp.eq.s32.totalorder %s21, 1
      %p93 = por %p91, %p92
      %p94 = scmp.ne.s32.totalorder %s85, %s86
      %p95 = scmp.eq.s32.totalorder %s21, 0
      %p96 = por %p94, %p95
      %p97 = scmp.ne.s32.totalorder %s85, %s86
      %p98 = scmp.eq.s32.totalorder %s22, 1
      %p99 = por %p97, %p98
      %p101 = scmp.ne.s32.totalorder %s86, %s100
      %p102 = scmp.eq.s32.totalorder %s22, 0
      %p103 = por %p101, %p102
      %s104 = ssub.s32 %s23, %s35
      %p105 = scmp.eq.s32.totalorder %s104, 0
      %s107 = sadd.s32 %s106, 1
      %s108 = scalar_select %p105, %s106, %s107
      %p111 = pneg %p105
      %p112 = scmp.eq.s32.totalorder %s16, 1
      %p113 = por %p111, %p112
      %p114 = scmp.ne.s32.totalorder %s106, %s109
      %p115 = scmp.eq.s32.totalorder %s16, 0
      %p116 = por %p114, %p115
      %p117 = scmp.ne.s32.totalorder %s106, %s109
      %p118 = scmp.eq.s32.totalorder %s21, 1
      %p119 = por %p117, %p118
      %p120 = scmp.ne.s32.totalorder %s109, %s110
      %p121 = scmp.eq.s32.totalorder %s21, 0
      %p122 = por %p120, %p121
      %p123 = scmp.ne.s32.totalorder %s109, %s110
      %p124 = scmp.eq.s32.totalorder %s22, 1
      %p125 = por %p123, %p124
      %p127 = scmp.ne.s32.totalorder %s110, %s126
      %p128 = scmp.eq.s32.totalorder %s22, 0
      %p129 = por %p127, %p128
      %p130 = scmp.le.s32.totalorder 1, %s16
      %p131 = scmp.lt.s32.totalorder %s16, 3
      %p132 = pnand %p130, %p131
      %p133 = pneg %p132
      // Predicated region
      $region9: #{tpu_custom_call.1} parent=5 // pred_check
        _
      $region10: #{tpu_custom_call.1} parent=5 // pred_check_branch
        %135 = sbr.rel (%p132) target = $region12
      $region11: #{tpu_custom_call.1} parent=5 // pred_region
        %s136 = ssub.s32 %s16, 1
        // Predicated region
        $region13: #{tpu_custom_call.1} parent=11 // pred_check
          %p137 = pneg %p75
        $region14: #{tpu_custom_call.1} parent=11 // pred_check_branch
          %139 = sbr.rel (%p137) target = $region16
        $region15: #{tpu_custom_call.1} parent=11 // pred_region
          %s141 = ssub.s32 2048, 2048
          %142 = vsyncadd [#allocation6], %s141
          %s143 = sshll.u32 [#allocation5], 4
          %s144 = int_to_ptr.vmem [resolvable:$true] %s143
          %149 = dma.hbm_to_vmem [thread:$0]  %s1, 2048, %s144, [#allocation6], 128, 128, 8
        $region16: #{tpu_custom_call.1} parent=11 // pred_fallthru
          _
        // Predicated region
        $region17: #{tpu_custom_call.1} parent=11 // pred_check
          %p150 = pneg %p96
        $region18: #{tpu_custom_call.1} parent=11 // pred_check_branch
          %152 = sbr.rel (%p150) target = $region20
        $region19: #{tpu_custom_call.1} parent=11 // pred_region
          %s154 = ssub.s32 2048, 2048
          %155 = vsyncadd [#allocation6], %s154
          %s156 = sshll.u32 [#allocation7], 4
          %s157 = int_to_ptr.vmem [resolvable:$true] %s156
          %162 = dma.hbm_to_vmem [thread:$0]  %s2, 2048, %s157, [#allocation6], 128, 128, 8
        $region20: #{tpu_custom_call.1} parent=11 // pred_fallthru
          _
      $region12: #{tpu_custom_call.1} parent=5 // pred_fallthru
        _
      %p163 = scmp.lt.s32.totalorder %s16, 2
      // Predicated region
      $region21: #{tpu_custom_call.1} parent=5 // pred_check
        %p164 = pneg %p163
      $region22: #{tpu_custom_call.1} parent=5 // pred_check_branch
        %166 = sbr.rel (%p164) target = $region24
      $region23: #{tpu_custom_call.1} parent=5 // pred_region
        // Predicated region
        $region25: #{tpu_custom_call.1} parent=23 // pred_check
          %p167 = pneg %p48
        $region26: #{tpu_custom_call.1} parent=23 // pred_check_branch
          %169 = sbr.rel (%p167) target = $region28
        $region27: #{tpu_custom_call.1} parent=23 // pred_region
          %s170 = sand.u32 %s38, 1
          %s171 = scalar_lea.sflag [#allocation3], %s170
          %s172 = sand.u32 %s38, 1
          %s173 = smul.addr %s172, 8
          %s174 = scalar_lea.vmem [#allocation2], %s173
          %s176 = ssub.s32 128, 128
          %177 = vsyncadd %s171, %s176
          %s178 = smul.addr %s23, 128
          %s179 = scalar_lea.hbm %s0, %s178
          %s181 = sshll.u32 %s174, 4
          %s182 = int_to_ptr.vmem [resolvable:$true] %s181
          %184 = dma.hbm_to_vmem [thread:$0]  %s179, 128, %s182, %s171
        $region28: #{tpu_custom_call.1} parent=23 // pred_fallthru
          _
      $region24: #{tpu_custom_call.1} parent=5 // pred_fallthru
        _
      %p185 = scmp.le.s32.totalorder 1, %s16
      %p186 = scmp.lt.s32.totalorder %s16, 3
      %p187 = pnand %p185, %p186
      %p188 = pneg %p187
      // Predicated region
      $region29: #{tpu_custom_call.1} parent=5 // pred_check
        _
      $region30: #{tpu_custom_call.1} parent=5 // pred_check_branch
        %190 = sbr.rel (%p187) target = $region32
      $region31: #{tpu_custom_call.1} parent=5 // pred_region
        %s191 = ssub.s32 %s16, 1
        %s192 = sand.u32 %s41, 1
        %s193 = scalar_lea.sflag [#allocation3], %s192
        %s194 = sand.u32 %s41, 1
        %s195 = smul.addr %s194, 8
        %s196 = scalar_lea.vmem [#allocation2], %s195
        // Predicated region
        $region33: #{tpu_custom_call.1} parent=31 // pred_check
          %p197 = pneg %p54
        $region34: #{tpu_custom_call.1} parent=31 // pred_check_branch
          %199 = sbr.rel (%p197) target = $region36
        $region35: #{tpu_custom_call.1} parent=31 // pred_region
          %200 = dma.done %s193, 128
        $region36: #{tpu_custom_call.1} parent=31 // pred_fallthru
          _
        // Predicated region
        $region37: #{tpu_custom_call.1} parent=31 // pred_check
          %p201 = pneg %p75
        $region38: #{tpu_custom_call.1} parent=31 // pred_check_branch
          %203 = sbr.rel (%p201) target = $region40
        $region39: #{tpu_custom_call.1} parent=31 // pred_region
          %204 = dma.done [#allocation6], 2048
        $region40: #{tpu_custom_call.1} parent=31 // pred_fallthru
          _
        // Predicated region
        $region41: #{tpu_custom_call.1} parent=31 // pred_check
          %p205 = pneg %p96
        $region42: #{tpu_custom_call.1} parent=31 // pred_check_branch
          %207 = sbr.rel (%p205) target = $region44
        $region43: #{tpu_custom_call.1} parent=31 // pred_region
          %208 = dma.done [#allocation6], 2048
        $region44: #{tpu_custom_call.1} parent=31 // pred_fallthru
          _
        %s209 = sand.u32 %s41, 1
        %s210 = scalar_lea.sflag [#allocation3], %s209
        %s211 = sand.u32 %s41, 1
        %s212 = smul.addr %s211, 8
        %s213 = scalar_lea.vmem [#allocation2], %s212
        %p214 = pneg %p54
        %p215 = pneg %p51
        %p216 = pneg %p75
        %p217 = pneg %p72
        %p218 = pneg %p96
        %p219 = pneg %p93
        %p220 = pneg %p122
        %p221 = pneg %p119
        %s222 = sand.u32 %s109, 1
        %s223 = scalar_lea.sflag [#allocation4], %s222
        %s224 = sand.u32 %s109, 1
        %s225 = smul.addr %s224, 8
        %s226 = scalar_lea.vmem [#allocation8], %s225
        %p227 = scmp.eq.s32.totalorder %s26, 0
        // Predicated region
        $region45: #{tpu_custom_call.1} parent=31 // pred_check
          %p228 = pneg %p227
        $region46: #{tpu_custom_call.1} parent=31 // pred_check_branch
          %230 = sbr.rel (%p228) target = $region48
        $region47: #{tpu_custom_call.1} parent=31 // pred_region
          %231 = vst [vmem:[%s226] sm:$0xff] 0.0
        $region48: #{tpu_custom_call.1} parent=31 // pred_fallthru
          _
        %s232 = smul.u32 %s26, 128
        %s233 = scalar_lea.vmem [#allocation5], %s232
        %v234 = vld [vmem:[%s233] sm:$0xff]
        %v235 = vld [vmem:[%s233 + $0x8] sm:$0xff]
        %v236 = vld [vmem:[%s233 + $0x10] sm:$0xff]
        %v237 = vld [vmem:[%s233 + $0x18] sm:$0xff]
        %v238 = vld [vmem:[%s233 + $0x20] sm:$0xff]
        %v239 = vld [vmem:[%s233 + $0x28] sm:$0xff]
        %v240 = vld [vmem:[%s233 + $0x30] sm:$0xff]
        %v241 = vld [vmem:[%s233 + $0x38] sm:$0xff]
        %v242 = vld [vmem:[%s233 + $0x40] sm:$0xff]
        %v243 = vld [vmem:[%s233 + $0x48] sm:$0xff]
        %v244 = vld [vmem:[%s233 + $0x50] sm:$0xff]
        %v245 = vld [vmem:[%s233 + $0x58] sm:$0xff]
        %v246 = vld [vmem:[%s233 + $0x60] sm:$0xff]
        %v247 = vld [vmem:[%s233 + $0x68] sm:$0xff]
        %v248 = vld [vmem:[%s233 + $0x70] sm:$0xff]
        %v249 = vld [vmem:[%s233 + $0x78] sm:$0xff]
        %s250 = scalar_lea.vmem [#allocation7], %s232
        %v251 = vld [vmem:[%s250] sm:$0xff]
        %v252 = vld [vmem:[%s250 + $0x8] sm:$0xff]
        %v253 = vld [vmem:[%s250 + $0x10] sm:$0xff]
        %v254 = vld [vmem:[%s250 + $0x18] sm:$0xff]
        %v255 = vld [vmem:[%s250 + $0x20] sm:$0xff]
        %v256 = vld [vmem:[%s250 + $0x28] sm:$0xff]
        %v257 = vld [vmem:[%s250 + $0x30] sm:$0xff]
        %v258 = vld [vmem:[%s250 + $0x38] sm:$0xff]
        %v259 = vld [vmem:[%s250 + $0x40] sm:$0xff]
        %v260 = vld [vmem:[%s250 + $0x48] sm:$0xff]
        %v261 = vld [vmem:[%s250 + $0x50] sm:$0xff]
        %v262 = vld [vmem:[%s250 + $0x58] sm:$0xff]
        %v263 = vld [vmem:[%s250 + $0x60] sm:$0xff]
        %v264 = vld [vmem:[%s250 + $0x68] sm:$0xff]
        %v265 = vld [vmem:[%s250 + $0x70] sm:$0xff]
        %v266 = vld [vmem:[%s250 + $0x78] sm:$0xff]
        %v267 = vld [vmem:[%s196] sm:$0xff]
        %268 = vmatprep.subr.mxu0 0.0
        %269 = vmatpush1.msra.mxu0 %v234
        %270 = vmatprep.subr.mxu0 0.0
        %271 = vmatpush1.msra.mxu0 %v235
        %272 = vmatprep.subr.mxu0 0.0
        %273 = vmatpush1.msra.mxu0 %v236
        %274 = vmatprep.subr.mxu0 0.0
        %275 = vmatpush1.msra.mxu0 %v237
        %276 = vmatprep.subr.mxu0 0.0
        %277 = vmatpush1.msra.mxu0 %v238
        %278 = vmatprep.subr.mxu0 0.0
        %279 = vmatpush1.msra.mxu0 %v239
        %280 = vmatprep.subr.mxu0 0.0
        %281 = vmatpush1.msra.mxu0 %v240
        %282 = vmatprep.subr.mxu0 0.0
        %283 = vmatpush1.msra.mxu0 %v241
        %284 = vmatprep.subr.mxu0 0.0
        %285 = vmatpush1.msra.mxu0 %v242
        %286 = vmatprep.subr.mxu0 0.0
        %287 = vmatpush1.msra.mxu0 %v243
        %288 = vmatprep.subr.mxu0 0.0
        %289 = vmatpush1.msra.mxu0 %v244
        %290 = vmatprep.subr.mxu0 0.0
        %291 = vmatpush1.msra.mxu0 %v245
        %292 = vmatprep.subr.mxu0 0.0
        %293 = vmatpush1.msra.mxu0 %v246
        %294 = vmatprep.subr.mxu0 0.0
        %295 = vmatpush1.msra.mxu0 %v247
        %296 = vmatprep.subr.mxu0 0.0
        %297 = vmatpush1.msra.mxu0 %v248
        %298 = vmatprep.subr.mxu0 0.0
        %299 = vmatpush1.msra.mxu0 %v249
        %300 = vmatprep.subr.mxu0 0.0
        %301 = vmatpush1.msra.mxu0 0.0
        %302 = vmatprep.subr.mxu0 0.0
        %303 = vmatpush1.msra.mxu0 0.0
        %304 = vmatprep.subr.mxu0 0.0
        %305 = vmatpush1.msra.mxu0 0.0
        %306 = vmatprep.subr.mxu0 0.0
        %307 = vmatpush1.msra.mxu0 0.0
        %308 = vmatprep.subr.mxu0 0.0
        %309 = vmatpush1.msra.mxu0 0.0
        %310 = vmatprep.subr.mxu0 0.0
        %311 = vmatpush1.msra.mxu0 0.0
        %312 = vmatprep.subr.mxu0 0.0
        %313 = vmatpush1.msra.mxu0 0.0
        %314 = vmatprep.subr.mxu0 0.0
        %315 = vmatpush1.msra.mxu0 0.0
        %316 = vmatprep.subr.mxu0 0.0
        %317 = vmatpush1.msra.mxu0 0.0
        %318 = vmatprep.subr.mxu0 0.0
        %319 = vmatpush1.msra.mxu0 0.0
        %320 = vmatprep.subr.mxu0 0.0
        %321 = vmatpush1.msra.mxu0 0.0
        %322 = vmatprep.subr.mxu0 0.0
        %323 = vmatpush1.msra.mxu0 0.0
        %324 = vmatprep.subr.mxu0 0.0
        %325 = vmatpush1.msra.mxu0 0.0
        %326 = vmatprep.subr.mxu0 0.0
        %327 = vmatpush1.msra.mxu0 0.0
        %328 = vmatprep.subr.mxu0 0.0
        %329 = vmatpush1.msra.mxu0 0.0
        %330 = vmatprep.subr.mxu0 0.0
        %331 = vmatpush1.msra.mxu0 0.0
        %332 = vmatprep.mubr.f32.mxu0 0.0
        %333 = vmatmul.mubr.f32.gmra.mrb[0].mxu0 %v267
        %v334 = vpop.f32.mrb[0].mxu0
        %v335 = vadd.f32 0.0, %v334
        %v336 = vpop.f32.mrb[0].mxu0
        %337 = vdwg.mxu0
        %v338 = vmul.f32 %v335, 0.5
        %v339 = vmul.f32 %v335, 0.70710677
        %v340 = verf.f32.pop %v339
        %v341 = vadd.f32 %v340, 1.0
        %v342 = vmul.f32 %v338, %v341
        %v343 = vld [vmem:[%s226] sm:$0xff]
        %344 = vmatprep.subr.mxu0 0.0
        %345 = vmatpush1.msra.mxu0 %v251
        %346 = vmatprep.subr.mxu0 0.0
        %347 = vmatpush1.msra.mxu0 %v252
        %348 = vmatprep.subr.mxu0 0.0
        %349 = vmatpush1.msra.mxu0 %v253
        %350 = vmatprep.subr.mxu0 0.0
        %351 = vmatpush1.msra.mxu0 %v254
        %352 = vmatprep.subr.mxu0 0.0
        %353 = vmatpush1.msra.mxu0 %v255
        %354 = vmatprep.subr.mxu0 0.0
        %355 = vmatpush1.msra.mxu0 %v256
        %356 = vmatprep.subr.mxu0 0.0
        %357 = vmatpush1.msra.mxu0 %v257
        %358 = vmatprep.subr.mxu0 0.0
        %359 = vmatpush1.msra.mxu0 %v258
        %360 = vmatprep.subr.mxu0 0.0
        %361 = vmatpush1.msra.mxu0 %v259
        %362 = vmatprep.subr.mxu0 0.0
        %363 = vmatpush1.msra.mxu0 %v260
        %364 = vmatprep.subr.mxu0 0.0
        %365 = vmatpush1.msra.mxu0 %v261
        %366 = vmatprep.subr.mxu0 0.0
        %367 = vmatpush1.msra.mxu0 %v262
        %368 = vmatprep.subr.mxu0 0.0
        %369 = vmatpush1.msra.mxu0 %v263
        %370 = vmatprep.subr.mxu0 0.0
        %371 = vmatpush1.msra.mxu0 %v264
        %372 = vmatprep.subr.mxu0 0.0
        %373 = vmatpush1.msra.mxu0 %v265
        %374 = vmatprep.subr.mxu0 0.0
        %375 = vmatpush1.msra.mxu0 %v266
        %376 = vmatprep.subr.mxu0 0.0
        %377 = vmatpush1.msra.mxu0 0.0
        %378 = vmatprep.subr.mxu0 0.0
        %379 = vmatpush1.msra.mxu0 0.0
        %380 = vmatprep.subr.mxu0 0.0
        %381 = vmatpush1.msra.mxu0 0.0
        %382 = vmatprep.subr.mxu0 0.0
        %383 = vmatpush1.msra.mxu0 0.0
        %384 = vmatprep.subr.mxu0 0.0
        %385 = vmatpush1.msra.mxu0 0.0
        %386 = vmatprep.subr.mxu0 0.0
        %387 = vmatpush1.msra.mxu0 0.0
        %388 = vmatprep.subr.mxu0 0.0
        %389 = vmatpush1.msra.mxu0 0.0
        %390 = vmatprep.subr.mxu0 0.0
        %391 = vmatpush1.msra.mxu0 0.0
        %392 = vmatprep.subr.mxu0 0.0
        %393 = vmatpush1.msra.mxu0 0.0
        %394 = vmatprep.subr.mxu0 0.0
        %395 = vmatpush1.msra.mxu0 0.0
        %396 = vmatprep.subr.mxu0 0.0
        %397 = vmatpush1.msra.mxu0 0.0
        %398 = vmatprep.subr.mxu0 0.0
        %399 = vmatpush1.msra.mxu0 0.0
        %400 = vmatprep.subr.mxu0 0.0
        %401 = vmatpush1.msra.mxu0 0.0
        %402 = vmatprep.subr.mxu0 0.0
        %403 = vmatpush1.msra.mxu0 0.0
        %404 = vmatprep.subr.mxu0 0.0
        %405 = vmatpush1.msra.mxu0 0.0
        %406 = vmatprep.subr.mxu0 0.0
        %407 = vmatpush1.msra.mxu0 0.0
        %408 = vmatprep.mubr.f32.mxu0 0.0
        %409 = vmatmul.mubr.f32.gmra.mrb[0].mxu0 %v342
        %v410 = vpop.f32.mrb[0].mxu0
        %v411 = vadd.f32 0.0, %v410
        %v412 = vpop.f32.mrb[0].mxu0
        %413 = vdwg.mxu0
        %v414 = vadd.f32 %v343, %v411
        %415 = vst [vmem:[%s226] sm:$0xff] %v414
        %s416 = sand.u32 %s109, 1
        %s417 = scalar_lea.sflag [#allocation4], %s416
        %s418 = sand.u32 %s109, 1
        %s419 = smul.addr %s418, 8
        %s420 = scalar_lea.vmem [#allocation8], %s419
        // Predicated region
        $region49: #{tpu_custom_call.1} parent=31 // pred_check
          %p421 = pneg %p119
        $region50: #{tpu_custom_call.1} parent=31 // pred_check_branch
          %423 = sbr.rel (%p421) target = $region52
        $region51: #{tpu_custom_call.1} parent=31 // pred_region
          %s425 = ssub.s32 128, 128
          %426 = vsyncadd %s417, %s425
          %s427 = smul.addr %s25, 128
          %s428 = scalar_lea.hbm %s3, %s427
          %s430 = sshll.u32 %s420, 4
          %s431 = int_to_ptr.vmem [resolvable:$true] %s430
          %433 = dma.vmem_to_hbm [thread:$0]  %s431, 128, %s428, %s417
        $region52: #{tpu_custom_call.1} parent=31 // pred_fallthru
          _
      $region32: #{tpu_custom_call.1} parent=5 // pred_fallthru
        _
      %p434 = scmp.le.s32.totalorder 2, %s16
      // Predicated region
      $region53: #{tpu_custom_call.1} parent=5 // pred_check
        %p435 = pneg %p434
      $region54: #{tpu_custom_call.1} parent=5 // pred_check_branch
        %437 = sbr.rel (%p435) target = $region56
      $region55: #{tpu_custom_call.1} parent=5 // pred_region
        %s438 = ssub.s32 %s16, 2
        // Predicated region
        $region57: #{tpu_custom_call.1} parent=55 // pred_check
          %p439 = pneg %p125
        $region58: #{tpu_custom_call.1} parent=55 // pred_check_branch
          %441 = sbr.rel (%p439) target = $region60
        $region59: #{tpu_custom_call.1} parent=55 // pred_region
          %s442 = sand.u32 %s110, 1
          %s443 = scalar_lea.sflag [#allocation4], %s442
          %s444 = sand.u32 %s110, 1
          %s445 = smul.addr %s444, 8
          %s446 = scalar_lea.vmem [#allocation8], %s445
          %447 = dma.done %s443, 128
        $region60: #{tpu_custom_call.1} parent=55 // pred_fallthru
          _
      $region56: #{tpu_custom_call.1} parent=5 // pred_fallthru
        _
    $region6: #{tpu_custom_call.1} parent=1 // loop_footer
      %s20 = sadd.s32 1, %s16
    $region7: #{tpu_custom_call.1} parent=1 // loop_footer_branch
      %15 = sbr.rel target = $region3
    $region8: #{tpu_custom_call.1} parent=1 // loop_exit
      _
    %448 = vsyncpa [#allocation3], 1
    %s449 = scalar_lea.sflag [#allocation3], 1
    %450 = vsyncpa %s449, 1
    %451 = vsyncpa [#allocation6], 1
    %452 = vsyncpa [#allocation4], 1
    %s453 = scalar_lea.sflag [#allocation4], 1
    %454 = vsyncpa %s453, 1

</llo_original>
